<compile_context>
chip_gen: v5e
topology: v5e:2x2
jax: 0.10.0
libtpu: 0.0.40
codegen_flags: <defaults>
</compile_context>

<pallas_src>
import math
import jax
import jax.numpy as jnp
from jax.experimental import pallas as pl
from jax.experimental.pallas import tpu as pltpu

# Cap the compiler's scoped VMEM budget well above what the default 512
# tiles need (~5 MiB) so user-supplied 1024 tiles still compile on v5e
# (16 MiB default scoped limit) while staying under v7x's 64 MiB physical.
_VMEM_LIMIT_BYTES = 48 * 1024 * 1024


def _pick_tile(n: int, cap: int, align: int) -> int:
    """Largest tile <= cap that divides n and is a multiple of `align`.

    Falls back to n itself (full-extent block, always layout-legal) when no
    aligned divisor exists -- this avoids materializing a padded copy of the
    [B, N, N] adjacency in HBM just to make the grid divide evenly.
    """
    if n <= cap:
        return n
    d = (cap // align) * align
    while d >= align:
        if n % d == 0:
            return d
        d -= align
    return n


# ---------------------------------------------------------------------------
# Stage 1: support = x @ W            grid = (B, N // ts)
# ---------------------------------------------------------------------------
def _support_kernel(x_ref, w_ref, o_ref):
    # x_ref: (1, ts, Fin), w_ref: (Fin, Fout) resident, o_ref: (1, ts, Fout)
    o_ref[0] = jnp.dot(
        x_ref[0], w_ref[...], preferred_element_type=jnp.float32
    ).astype(o_ref.dtype)


# ---------------------------------------------------------------------------
# Stage 2: out = adj @ support (+ bias)   grid = (B, N // tm, N // tk)
# Contraction axis k is last; the output block index_map ignores k, so the
# f32 output tile stays resident in VMEM and we accumulate into it directly.
# ---------------------------------------------------------------------------
def _aggregate_kernel(adj_ref, s_ref, o_ref):
    k = pl.program_id(2)
    part = jnp.dot(adj_ref[0], s_ref[0], preferred_element_type=jnp.float32)

    @pl.when(k == 0)
    def _():
        o_ref[0] = part

    @pl.when(k != 0)
    def _():
        o_ref[0] += part


def _aggregate_bias_kernel(adj_ref, s_ref, b_ref, o_ref):
    k = pl.program_id(2)
    part = jnp.dot(adj_ref[0], s_ref[0], preferred_element_type=jnp.float32)

    @pl.when(k == 0)
    def _():
        o_ref[0] = part

    @pl.when(k != 0)
    def _():
        o_ref[0] += part

    @pl.when(k == pl.num_programs(2) - 1)
    def _():
        # bias broadcast (1, Fout) over rows, folded into the final k step.
        o_ref[0] = o_ref[0] + b_ref[...]


def gcn_layer(x, adj, weight, bias=None, *, tm=512, tk=512, ts=512,
              use_bf16=False):
    """Pallas implementation of GCNLayer.forward.

    x:      [B, N, Fin]
    adj:    [B, N, N]
    weight: [Fin, Fout]
    bias:   [1, 1, Fout] or None
    returns [B, N, Fout] float32

    use_bf16=True halves the dominant HBM stream (adj) and runs the MXU at
    its native bf16 rate but deviates from PyTorch `.float()` numerics.
    """
    # Match PyTorch `.float()` semantics: operands cast once in the wrapper.
    x = jnp.asarray(x, jnp.float32)
    adj = jnp.asarray(adj, jnp.float32)
    weight = jnp.asarray(weight, jnp.float32)

    B, N, Fin = x.shape
    Fin_w, Fout = weight.shape
    assert Fin_w == Fin, "weight in_features mismatch"

    compute_dtype = jnp.bfloat16 if use_bf16 else jnp.float32
    x_c = x.astype(compute_dtype)
    w_c = weight.astype(compute_dtype)
    adj_c = adj.astype(compute_dtype)

    # Tile selection: divisors of N so no HBM-side padding of adj / output is
    # ever materialized.  Sublane dims need multiples of 8, the adj lane
    # (contraction) dim needs a multiple of 128, unless full-extent.
    ts_ = _pick_tile(N, ts, 8)      # support kernel row tile
    tm_ = _pick_tile(N, tm, 8)      # output row tile
    tk_ = _pick_tile(N, tk, 128)    # contraction tile (adj cols / support rows)

    # ---- Stage 1: support = x @ W ----------------------------------------
    support = pl.pallas_call(
        _support_kernel,
        out_shape=jax.ShapeDtypeStruct((B, N, Fout), compute_dtype),
        grid=(B, N // ts_),
        in_specs=[
            pl.BlockSpec((1, ts_, Fin), lambda b, i: (b, i, 0)),   # x
            pl.BlockSpec((Fin, Fout), lambda b, i: (0, 0)),        # weight
        ],
        out_specs=pl.BlockSpec((1, ts_, Fout), lambda b, i: (b, i, 0)),
        compiler_params=pltpu.CompilerParams(
            dimension_semantics=("parallel", "parallel"),
            vmem_limit_bytes=_VMEM_LIMIT_BYTES),
    )(x_c, w_c)

    # ---- Stage 2: out = adj @ support (+ bias) ----------------------------
    adj_spec = pl.BlockSpec((1, tm_, tk_), lambda b, i, k: (b, i, k))
    sup_spec = pl.BlockSpec((1, tk_, Fout), lambda b, i, k: (b, k, 0))
    out_spec = pl.BlockSpec((1, tm_, Fout), lambda b, i, k: (b, i, 0))

    if bias is not None:
        b2 = jnp.asarray(bias, jnp.float32).reshape(1, Fout)
        kernel = _aggregate_bias_kernel
        in_specs = [adj_spec, sup_spec,
                    pl.BlockSpec((1, Fout), lambda b, i, k: (0, 0))]
        args = (adj_c, support, b2)
    else:
        kernel = _aggregate_kernel
        in_specs = [adj_spec, sup_spec]
        args = (adj_c, support)

    out = pl.pallas_call(
        kernel,
        out_shape=jax.ShapeDtypeStruct((B, N, Fout), jnp.float32),
        grid=(B, N // tm_, N // tk_),
        in_specs=in_specs,
        out_specs=out_spec,
        compiler_params=pltpu.CompilerParams(
            dimension_semantics=("parallel", "parallel", "arbitrary"),
            vmem_limit_bytes=_VMEM_LIMIT_BYTES),
    )(*args)

    return out


if __name__ == "__main__":
    # Small shapes consistent with the module: batch=2, nodes=8, in=16, out=32.
    B, N, Fin, Fout = 2, 8, 16, 32
    key = jax.random.PRNGKey(0)
    kx, kadj, kw, kb, kx2, kadj2 = jax.random.split(key, 6)

    # Parameter init matching reset_parameters(): uniform(-stdv, stdv),
    # stdv = 1/sqrt(out_features).
    stdv = 1.0 / math.sqrt(Fout)
    weight = jax.random.uniform(kw, (Fin, Fout), jnp.float32, -stdv, stdv)
    bias = jax.random.uniform(kb, (1, 1, Fout), jnp.float32, -stdv, stdv)

    x = jax.random.normal(kx, (B, N, Fin), jnp.float32)
    adj = jax.random.uniform(kadj, (B, N, N), jnp.float32)

    # bias=False path (module default) and bias=True path.
    out_nobias = jax.block_until_ready(gcn_layer(x, adj, weight, bias=None))
    out_bias = jax.block_until_ready(gcn_layer(x, adj, weight, bias=bias))

    hi = jax.lax.Precision.HIGHEST
    ref = jnp.einsum("bnm,bmf->bnf", adj,
                     jnp.einsum("bni,io->bno", x, weight, precision=hi),
                     precision=hi)
    assert jnp.allclose(out_nobias, ref, atol=1e-5, rtol=1e-5)
    assert jnp.allclose(out_bias, ref + bias, atol=1e-5, rtol=1e-5)

    # Exercise the multi-tile path (several row / contraction / support tiles,
    # accumulation into the resident output block, bias at the last k step).
    N2 = 256
    x2 = jax.random.normal(kx2, (B, N2, Fin), jnp.float32)
    adj2 = jax.random.uniform(kadj2, (B, N2, N2), jnp.float32)
    out2 = jax.block_until_ready(
        gcn_layer(x2, adj2, weight, bias=bias, tm=128, tk=128, ts=128))
    ref2 = jnp.einsum("bnm,bmf->bnf", adj2,
                      jnp.einsum("bni,io->bno", x2, weight, precision=hi),
                      precision=hi) + bias
    assert jnp.allclose(out2, ref2, atol=1e-3, rtol=1e-4)

    print("KERNEL_OK")
</pallas_src>

<mosaic_0001>
module attributes {stable_mosaic.version = 11 : i64} {
  func.func @_support_kernel(%arg0: i32, %arg1: i32, %arg2: memref<1x8x16xf32, #tpu.memory_space<vmem>>, %arg3: memref<16x32xf32, #tpu.memory_space<vmem>>, %arg4: memref<1x8x32xf32, #tpu.memory_space<vmem>>) attributes {dimension_semantics = [#tpu.dimension_semantics<parallel>, #tpu.dimension_semantics<parallel>], iteration_bounds = array<i64: 2, 1>, scalar_prefetch = 0 : i64, scratch_operands = 0 : i64, tpu.core_type = #tpu.core_type<tc>, window_params = [{transform_indices = @transform_0, window_bounds = array<i64: 1, 8, 16>}, {pipeline_mode = #tpu.pipeline_mode<synchronous>, transform_indices = @transform_1, window_bounds = array<i64: 16, 32>}, {transform_indices = @transform_2, window_bounds = array<i64: 1, 8, 32>}]} {
    %c0 = arith.constant 0 : index
    %c0_0 = arith.constant 0 : index
    %c0_1 = arith.constant 0 : index
    %0 = vector.load %arg2[%c0, %c0_0, %c0_1] : memref<1x8x16xf32, #tpu.memory_space<vmem>>, vector<1x8x16xf32>
    %1 = vector.shape_cast %0 : vector<1x8x16xf32> to vector<8x16xf32>
    %c0_2 = arith.constant 0 : index
    %c0_3 = arith.constant 0 : index
    %2 = vector.load %arg3[%c0_2, %c0_3] : memref<16x32xf32, #tpu.memory_space<vmem>>, vector<16x32xf32>
    %cst = arith.constant dense<0.000000e+00> : vector<8x32xf32>
    %3 = tpu.matmul %1, %2, %cst {dimension_numbers = #tpu.dot_dimension_numbers<[1], [0], [0], [1], [0, 0, 1, 1], [], []>} : vector<8x16xf32>, vector<16x32xf32>, vector<8x32xf32> -> vector<8x32xf32>
    %c0_4 = arith.constant 0 : index
    %c0_5 = arith.constant 0 : index
    %c0_6 = arith.constant 0 : index
    %4 = vector.load %arg4[%c0_4, %c0_5, %c0_6] : memref<1x8x32xf32, #tpu.memory_space<vmem>>, vector<1x8x32xf32>
    %5 = vector.shape_cast %4 : vector<1x8x32xf32> to vector<8x32xf32>
    %6 = vector.shape_cast %3 : vector<8x32xf32> to vector<1x8x32xf32>
    tpu.vector_store %arg4[%c0_4, %c0_5, %c0_6], %6 {strides = array<i32>} : memref<1x8x32xf32, #tpu.memory_space<vmem>>, vector<1x8x32xf32>,
    return
  }
  func.func @transform_0(%arg0: i32, %arg1: i32) -> (i32, i32, i32) {
    %c0_i32 = arith.constant 0 : i32
    %c0_i32_0 = arith.constant 0 : i32
    return %arg0, %arg1, %c0_i32 : i32, i32, i32
  }
  func.func @transform_1(%arg0: i32, %arg1: i32) -> (i32, i32) {
    %c0_i32 = arith.constant 0 : i32
    %c0_i32_0 = arith.constant 0 : i32
    %c0_i32_1 = arith.constant 0 : i32
    return %c0_i32, %c0_i32_0 : i32, i32
  }
  func.func @transform_2(%arg0: i32, %arg1: i32) -> (i32, i32, i32) {
    %c0_i32 = arith.constant 0 : i32
    %c0_i32_0 = arith.constant 0 : i32
    return %arg0, %arg1, %c0_i32 : i32, i32, i32
  }
}

</mosaic_0001>

<llo_original>
// kernel: tpu_custom_call.1
$region0: #{tpu_custom_call.1}
  #allocation0 [shape = 'u32[]', space=smem, size = 0x4, offset = 0x4, fixed_abs, tag = 'smem constant byte address 0x4 - core index']
  #allocation1 [shape = 'u32[72,128]{1,0:T(1,128)}', space=vmem, size = 0x9000, scoped, tag = 'internal scratch']
  %s0 = inlined_call_operand.hbm [shape: f32[2,8,16], index: 0, kind: input, shape index: {}]
  %s1 = inlined_call_operand.hbm [shape: f32[16,32], index: 1, kind: input, shape index: {}]
  %s2 = inlined_call_operand.hbm [shape: f32[2,8,32], index: 2, kind: output, shape index: {}]
  %s3 = sld [smem:[#allocation0]]
  $region49: #{tpu_custom_call.1} parent=0
    _
  %s5 = ssub.s32 1, %s3
  %s6 = scalar_select 0, %s5, %s3
  $region1: #{tpu_custom_call.1} parent=0
    #allocation2 [shape = 'u8[8192]{0}', space=vmem, size = 0x2000, scoped, tag = 'input window, operand 0']
    #allocation3 [shape = 's32[2]{0}', space=sflag, size = 0x8, scoped, tag = 'scoped memory for tpu_custom_call.1']
    #allocation4 [shape = 's32[2]{0}', space=sflag, size = 0x8, scoped, tag = 'scoped memory for tpu_custom_call.1']
    #allocation5 [shape = 'u8[8192]{0}', space=vmem, size = 0x2000, scoped, tag = 'input window, operand 1, single buffered']
    #allocation6 [shape = 's32[1]{0}', space=sflag, size = 0x4, scoped, tag = 'scoped memory for tpu_custom_call.1']
    #allocation7 [shape = 'u8[8192]{0}', space=vmem, size = 0x2000, scoped, tag = 'output window, operand 0']
    %7 = vsyncpa [#allocation3], 0
    %s8 = scalar_lea.sflag [#allocation3], 1
    %9 = vsyncpa %s8, 0
    %10 = vsyncpa [#allocation6], 0
    %11 = vsyncpa [#allocation4], 0
    %s12 = scalar_lea.sflag [#allocation4], 1
    %13 = vsyncpa %s12, 0
    loop: start=0, step=1, limit=4
    $region2: #{tpu_custom_call.1} parent=1 // loop_pre_header
      _
    $region3: #{tpu_custom_call.1} parent=1 // loop_header
      %s15 = sphi 0, %s19
      %p16 = scmp.ge.s32.totalorder %s15, 4
      %s22 = sphi 0, %s34
      %s23 = sphi 0, %s30
      %s24 = sphi 0, %s22
      %s25 = sphi 0, %s23
      %s26 = sphi 0, %s24
      %s27 = sphi 0, %s25
      %s39 = sphi 0, %s41
      %s42 = sphi 0, %s39
      %s43 = sphi 0, %s42
      %s59 = sphi 0, %s43
      %s63 = sphi 0, %s63
      %s65 = sphi 0, %s63
      %s66 = sphi 0, %s65
      %s80 = sphi 0, %s66
      %s88 = sphi 0, %s90
      %s91 = sphi 0, %s88
      %s92 = sphi 0, %s91
      %s108 = sphi 0, %s92
    $region4: #{tpu_custom_call.1} parent=1 // loop_header_branch
      %18 = sbr.rel (%p16) target = $region8
    $region5: #{tpu_custom_call.1} parent=1 // loop_body
      %s20 = ssub.s32 %s15, 1
      %s21 = ssub.s32 %s15, 2
      %s28 = sadd.s32 1, %s23
      %p29 = scmp.ge.s32.totalorder %s28, 1
      %s30 = scalar_select %p29, 0, %s28
      %s31 = sadd.s32 1, %s22
      %s32 = scalar_select %p29, %s31, %s22
      %p33 = scmp.ge.s32.totalorder %s32, 2
      %s34 = scalar_select %p33, 0, %s32
      %s35 = ssub.s32 %s22, %s34
      %s36 = ssub.s32 %s23, %s30
      %s37 = sor.u32 %s35, %s36
      %p38 = scmp.eq.s32.totalorder %s37, 0
      %s40 = sadd.s32 %s39, 1
      %s41 = scalar_select %p38, %s39, %s40
      %p44 = pneg %p38
      %p45 = scmp.eq.s32.totalorder %s15, 1
      %p46 = por %p44, %p45
      %p47 = scmp.ne.s32.totalorder %s39, %s42
      %p48 = scmp.eq.s32.totalorder %s15, 0
      %p49 = por %p47, %p48
      %p50 = scmp.ne.s32.totalorder %s39, %s42
      %p51 = scmp.eq.s32.totalorder %s20, 1
      %p52 = por %p50, %p51
      %p53 = scmp.ne.s32.totalorder %s42, %s43
      %p54 = scmp.eq.s32.totalorder %s20, 0
      %p55 = por %p53, %p54
      %p56 = scmp.ne.s32.totalorder %s42, %s43
      %p57 = scmp.eq.s32.totalorder %s21, 1
      %p58 = por %p56, %p57
      %p60 = scmp.ne.s32.totalorder %s43, %s59
      %p61 = scmp.eq.s32.totalorder %s21, 0
      %p62 = por %p60, %p61
      %s64 = sadd.s32 %s63, 1
      %p67 = scmp.eq.s32.totalorder %s15, 1
      %p68 = scmp.ne.s32.totalorder %s63, %s65
      %p69 = scmp.eq.s32.totalorder %s15, 0
      %p70 = por %p68, %p69
      %p71 = scmp.ne.s32.totalorder %s63, %s65
      %p72 = scmp.eq.s32.totalorder %s20, 1
      %p73 = por %p71, %p72
      %p74 = scmp.ne.s32.totalorder %s65, %s66
      %p75 = scmp.eq.s32.totalorder %s20, 0
      %p76 = por %p74, %p75
      %p77 = scmp.ne.s32.totalorder %s65, %s66
      %p78 = scmp.eq.s32.totalorder %s21, 1
      %p79 = por %p77, %p78
      %p81 = scmp.ne.s32.totalorder %s66, %s80
      %p82 = scmp.eq.s32.totalorder %s21, 0
      %p83 = por %p81, %p82
      %s84 = ssub.s32 %s22, %s34
      %s85 = ssub.s32 %s23, %s30
      %s86 = sor.u32 %s84, %s85
      %p87 = scmp.eq.s32.totalorder %s86, 0
      %s89 = sadd.s32 %s88, 1
      %s90 = scalar_select %p87, %s88, %s89
      %p93 = pneg %p87
      %p94 = scmp.eq.s32.totalorder %s15, 1
      %p95 = por %p93, %p94
      %p96 = scmp.ne.s32.totalorder %s88, %s91
      %p97 = scmp.eq.s32.totalorder %s15, 0
      %p98 = por %p96, %p97
      %p99 = scmp.ne.s32.totalorder %s88, %s91
      %p100 = scmp.eq.s32.totalorder %s20, 1
      %p101 = por %p99, %p100
      %p102 = scmp.ne.s32.totalorder %s91, %s92
      %p103 = scmp.eq.s32.totalorder %s20, 0
      %p104 = por %p102, %p103
      %p105 = scmp.ne.s32.totalorder %s91, %s92
      %p106 = scmp.eq.s32.totalorder %s21, 1
      %p107 = por %p105, %p106
      %p109 = scmp.ne.s32.totalorder %s92, %s108
      %p110 = scmp.eq.s32.totalorder %s21, 0
      %p111 = por %p109, %p110
      %p112 = scmp.le.s32.totalorder 1, %s15
      %p113 = scmp.lt.s32.totalorder %s15, 3
      %p114 = pnand %p112, %p113
      %p115 = pneg %p114
      // Predicated region
      $region9: #{tpu_custom_call.1} parent=5 // pred_check
        _
      $region10: #{tpu_custom_call.1} parent=5 // pred_check_branch
        %117 = sbr.rel (%p114) target = $region12
      $region11: #{tpu_custom_call.1} parent=5 // pred_region
        %s118 = ssub.s32 %s15, 1
        // Predicated region
        $region13: #{tpu_custom_call.1} parent=11 // pred_check
          %p119 = pneg %p76
        $region14: #{tpu_custom_call.1} parent=11 // pred_check_branch
          %121 = sbr.rel (%p119) target = $region16
        $region15: #{tpu_custom_call.1} parent=11 // pred_region
          %123 = vsyncadd [#allocation6], 0
          %s124 = sshll.u32 %s1, 4
          %s125 = int_to_ptr.hbm [resolvable:$true] %s124
          %s126 = sshll.u32 [#allocation5], 4
          %s127 = int_to_ptr.vmem [resolvable:$true] %s126
          %132 = dma.hbm_to_vmem [thread:$0]  %s125, 256, %s127, [#allocation6], 128, 128, 8
        $region16: #{tpu_custom_call.1} parent=11 // pred_fallthru
          _
      $region12: #{tpu_custom_call.1} parent=5 // pred_fallthru
        _
      %p133 = scmp.lt.s32.totalorder %s15, 2
      // Predicated region
      $region17: #{tpu_custom_call.1} parent=5 // pred_check
        %p134 = pneg %p133
      $region18: #{tpu_custom_call.1} parent=5 // pred_check_branch
        %136 = sbr.rel (%p134) target = $region20
      $region19: #{tpu_custom_call.1} parent=5 // pred_region
        // Predicated region
        $region21: #{tpu_custom_call.1} parent=19 // pred_check
          %p137 = pneg %p49
        $region22: #{tpu_custom_call.1} parent=19 // pred_check_branch
          %139 = sbr.rel (%p137) target = $region24
        $region23: #{tpu_custom_call.1} parent=19 // pred_region
          %s140 = sand.u32 %s39, 1
          %s141 = scalar_lea.sflag [#allocation3], %s140
          %s142 = sand.u32 %s39, 1
          %s143 = smul.addr %s142, 8
          %s144 = scalar_lea.vmem [#allocation2], %s143
          %146 = vsyncadd %s141, 0
          %s147 = sadd.s32 %s23, %s22
          %s148 = smul.addr %s147, 8
          %s149 = scalar_lea.hbm %s0, %s148
          %s151 = sshll.u32 %s149, 4
          %s152 = int_to_ptr.hbm [resolvable:$true] %s151
          %s153 = sshll.u32 %s144, 4
          %s154 = int_to_ptr.vmem [resolvable:$true] %s153
          %156 = dma.hbm_to_vmem [thread:$0]  %s152, 128, %s154, %s141
        $region24: #{tpu_custom_call.1} parent=19 // pred_fallthru
          _
      $region20: #{tpu_custom_call.1} parent=5 // pred_fallthru
        _
      %p157 = scmp.le.s32.totalorder 1, %s15
      %p158 = scmp.lt.s32.totalorder %s15, 3
      %p159 = pnand %p157, %p158
      %p160 = pneg %p159
      // Predicated region
      $region25: #{tpu_custom_call.1} parent=5 // pred_check
        _
      $region26: #{tpu_custom_call.1} parent=5 // pred_check_branch
        %162 = sbr.rel (%p159) target = $region28
      $region27: #{tpu_custom_call.1} parent=5 // pred_region
        %s163 = ssub.s32 %s15, 1
        %s164 = sand.u32 %s42, 1
        %s165 = scalar_lea.sflag [#allocation3], %s164
        %s166 = sand.u32 %s42, 1
        %s167 = smul.addr %s166, 8
        %s168 = scalar_lea.vmem [#allocation2], %s167
        // Predicated region
        $region29: #{tpu_custom_call.1} parent=27 // pred_check
          %p169 = pneg %p55
        $region30: #{tpu_custom_call.1} parent=27 // pred_check_branch
          %171 = sbr.rel (%p169) target = $region32
        $region31: #{tpu_custom_call.1} parent=27 // pred_region
          %173 = dma.done %s165, 128
        $region32: #{tpu_custom_call.1} parent=27 // pred_fallthru
          _
        // Predicated region
        $region33: #{tpu_custom_call.1} parent=27 // pred_check
          %p174 = pneg %p76
        $region34: #{tpu_custom_call.1} parent=27 // pred_check_branch
          %176 = sbr.rel (%p174) target = $region36
        $region35: #{tpu_custom_call.1} parent=27 // pred_region
          %178 = dma.done [#allocation6], 256
        $region36: #{tpu_custom_call.1} parent=27 // pred_fallthru
          _
        %s179 = sand.u32 %s42, 1
        %s180 = scalar_lea.sflag [#allocation3], %s179
        %s181 = sand.u32 %s42, 1
        %s182 = smul.addr %s181, 8
        %s183 = scalar_lea.vmem [#allocation2], %s182
        %p184 = pneg %p55
        %p185 = pneg %p52
        %p186 = pneg %p76
        %p187 = pneg %p73
        %p188 = pneg %p104
        %p189 = pneg %p101
        %s190 = sand.u32 %s91, 1
        %s191 = scalar_lea.sflag [#allocation4], %s190
        %s192 = sand.u32 %s91, 1
        %s193 = smul.addr %s192, 8
        %s194 = scalar_lea.vmem [#allocation7], %s193
        %v195 = vld [vmem:[%s168] sm:$0xff]
        %v196 = vld [vmem:[#allocation5] sm:$0xff]
        %v197 = vld [vmem:[#allocation5 + $0x8] sm:$0xff]
        %vm198 = vcmask 130048
        %v200 = vsel %vm198, %v195, 0
        %202 = vmatpush.msra.mxu0 0.0
        %203 = vmatpush.msra.mxu0 0.0
        %204 = vmatpush.msra.mxu0 0.0
        %205 = vmatpush.msra.mxu0 0.0
        %206 = vmatpush.msra.mxu0 0.0
        %207 = vmatpush.msra.mxu0 0.0
        %208 = vmatpush.msra.mxu0 0.0
        %209 = vmatpush.msra.mxu0 0.0
        %210 = vmatpush.msra.mxu0 0.0
        %211 = vmatpush.msra.mxu0 0.0
        %212 = vmatpush.msra.mxu0 0.0
        %213 = vmatpush.msra.mxu0 0.0
        %214 = vmatpush.msra.mxu0 0.0
        %215 = vmatpush.msra.mxu0 0.0
        %216 = vmatpush.msra.mxu0 %v197
        %217 = vmatpush.msra.mxu0 %v196
        %218 = vmatmul.f32.gmra.mxu0 %v200
        %v219 = vpop.f32.mrf.mxu0
        %v220 = vadd.f32 0.0, %v219
        %221 = vdwg.mxu0
        %vm222 = vcmask 261120
        %223 = vst.msk [vmem:[%s194] sm:$0xff] %vm222, %v220
        %s224 = sand.u32 %s91, 1
        %s225 = scalar_lea.sflag [#allocation4], %s224
        %s226 = sand.u32 %s91, 1
        %s227 = smul.addr %s226, 8
        %s228 = scalar_lea.vmem [#allocation7], %s227
        // Predicated region
        $region37: #{tpu_custom_call.1} parent=27 // pred_check
          %p229 = pneg %p101
        $region38: #{tpu_custom_call.1} parent=27 // pred_check_branch
          %231 = sbr.rel (%p229) target = $region40
        $region39: #{tpu_custom_call.1} parent=27 // pred_region
          %233 = vsyncadd %s225, 0
          %s234 = sadd.s32 %s25, %s24
          %s235 = smul.addr %s234, 8
          %s236 = scalar_lea.hbm %s2, %s235
          %s238 = sshll.u32 %s228, 4
          %s239 = int_to_ptr.vmem [resolvable:$true] %s238
          %s240 = sshll.u32 %s236, 4
          %s241 = int_to_ptr.hbm [resolvable:$true] %s240
          %243 = dma.vmem_to_hbm [thread:$0]  %s239, 128, %s241, %s225
        $region40: #{tpu_custom_call.1} parent=27 // pred_fallthru
          _
      $region28: #{tpu_custom_call.1} parent=5 // pred_fallthru
        _
      %p244 = scmp.le.s32.totalorder 2, %s15
      // Predicated region
      $region41: #{tpu_custom_call.1} parent=5 // pred_check
        %p245 = pneg %p244
      $region42: #{tpu_custom_call.1} parent=5 // pred_check_branch
        %247 = sbr.rel (%p245) target = $region44
      $region43: #{tpu_custom_call.1} parent=5 // pred_region
        %s248 = ssub.s32 %s15, 2
        // Predicated region
        $region45: #{tpu_custom_call.1} parent=43 // pred_check
          %p249 = pneg %p107
        $region46: #{tpu_custom_call.1} parent=43 // pred_check_branch
          %251 = sbr.rel (%p249) target = $region48
        $region47: #{tpu_custom_call.1} parent=43 // pred_region
          %s252 = sand.u32 %s92, 1
          %s253 = scalar_lea.sflag [#allocation4], %s252
          %s254 = sand.u32 %s92, 1
          %s255 = smul.addr %s254, 8
          %s256 = scalar_lea.vmem [#allocation7], %s255
          %258 = dma.done %s253, 128
        $region48: #{tpu_custom_call.1} parent=43 // pred_fallthru
          _
      $region44: #{tpu_custom_call.1} parent=5 // pred_fallthru
        _
    $region6: #{tpu_custom_call.1} parent=1 // loop_footer
      %s19 = sadd.s32 1, %s15
    $region7: #{tpu_custom_call.1} parent=1 // loop_footer_branch
      %14 = sbr.rel target = $region3
    $region8: #{tpu_custom_call.1} parent=1 // loop_exit
      _
    %259 = vsyncpa [#allocation3], 1
    %s260 = scalar_lea.sflag [#allocation3], 1
    %261 = vsyncpa %s260, 1
    %262 = vsyncpa [#allocation6], 1
    %263 = vsyncpa [#allocation4], 1
    %s264 = scalar_lea.sflag [#allocation4], 1
    %265 = vsyncpa %s264, 1

</llo_original>
